<compile_context>
chip_gen: v7x
topology: tpu7x:2x2x1
jax: 0.10.0
libtpu: 0.0.40
codegen_flags: <defaults>
</compile_context>

<pallas_src>
import jax
import jax.numpy as jnp
from jax.experimental import pallas as pl
from jax.experimental.pallas import tpu as pltpu


# ----------------------------------------------------------------------------
# Kernel
# ----------------------------------------------------------------------------
def avga_kernel(v_ref, a_ref, w_aud_t_ref, b_aud_ref, w_vid_t_ref, b_vid_ref,
                w_v_t_ref, w_g_t_ref, w_h_ref, out_ref):
    tb, n, v_dim = v_ref.shape
    m = w_v_t_ref.shape[1]

    # ---- audio path (tiny GEMMs; kept in f32 for accuracy) ------------------
    # a_t = relu(affine_audio(audio))                       -> (TB, H)
    a_h = jnp.maximum(
        jnp.dot(a_ref[...], w_aud_t_ref[...], preferred_element_type=jnp.float32)
        + b_aud_ref[...], 0.0)
    # affine_g(a_t)                                          -> (TB, M)
    g = jnp.dot(a_h, w_g_t_ref[...], preferred_element_type=jnp.float32)

    # ---- video path: one flattened lane-dense GEMM pair, bf16 in / f32 acc --
    # Reshape is free when N % 8 == 0 (see TODO in the header for N = 49).
    v_flat = v_ref[...].reshape(tb * n, v_dim).astype(jnp.bfloat16)   # (TB*N, V)
    # v_t = relu(affine_video(V))                            -> (TB*N, H)
    v_h = jnp.maximum(
        jnp.dot(v_flat, w_vid_t_ref[...], preferred_element_type=jnp.float32)
        + b_vid_ref[...], 0.0)
    # affine_v(v_t)                                          -> (TB*N, M)
    cv = jnp.dot(v_h.astype(jnp.bfloat16), w_v_t_ref[...],
                 preferred_element_type=jnp.float32)

    # PyTorch `.unsqueeze(2)` broadcast: content[b,n,j] = cv[b,n,j] + g[b,n]
    # (valid because N == M, asserted in the wrapper).
    content = cv.reshape(tb, n, m) + g[:, :, None]           # (TB, N, M)

    # z[b,n] = sum_j w_h[j] * tanh(content[b,n,j])           -> (TB, N)
    z = jnp.sum(jnp.tanh(content) * w_h_ref[...].reshape(1, 1, m), axis=-1)

    # softmax over the N spatial positions (EUP approx reciprocal for the norm)
    z = z - jnp.max(z, axis=-1, keepdims=True)
    e = jnp.exp(z)
    alpha = e * pl.reciprocal(jnp.sum(e, axis=-1, keepdims=True), approx=True)

    # c[b,d] = sum_n alpha[b,n] * V[b,n,d]
    # Re-read the video block from its resident VMEM buffer instead of keeping
    # the value live across the GEMMs/softmax (keeps vreg pressure down).
    c = jnp.sum(v_ref[...] * alpha[:, :, None], axis=1)      # (TB, V_DIM) f32
    out_ref[...] = c.astype(out_ref.dtype)


# ----------------------------------------------------------------------------
# Tiling helpers (generation-aware, pad-free)
# ----------------------------------------------------------------------------
def _tpu_vmem_bytes():
    """Per-TensorCore VMEM capacity; conservative v7x-like fallback (64 MiB)."""
    try:
        info = pltpu.get_tpu_info()
        for name in ("vmem_capacity_bytes", "vmem_bytes", "vmem_size_bytes"):
            v = getattr(info, name, None)
            if v:
                return int(v)
    except Exception:
        pass
    return 64 << 20


def _choose_tile(BT, N, V_DIM):
    """Pick (tb, vmem_limit_bytes).

    tb rules: multiple of 8 (or == BT), prefer a divisor of BT (no padding /
    ragged tail), prefer an even grid length (balances v7x's two TensorCores),
    and cap the per-step video block so double-buffering + intermediates fit
    the generation's VMEM.
    """
    vmem = _tpu_vmem_bytes()
    big_vmem = vmem >= (100 << 20)              # v5e / v6e: 128 MiB physical
    target_block_bytes = (14 << 20) if big_vmem else (8 << 20)
    vmem_limit = (96 << 20) if big_vmem else (56 << 20)

    row_bytes = 4 * N * V_DIM
    target_rows = max(8, target_block_bytes // row_bytes)

    if BT <= target_rows:
        # Whole problem fits in one block; split in two when cleanly possible
        # so both v7x TensorCores get a block.
        if BT >= 16 and BT % 16 == 0:
            return BT // 2, vmem_limit
        return BT, vmem_limit

    # Divisors of BT that are multiples of 8 and <= target (no pad, no ragged
    # tail); among them prefer those giving an even number of grid steps.
    cands = [d for d in range(8, int(target_rows) + 1, 8) if BT % d == 0]
    if cands:
        even = [d for d in cands if (BT // d) % 2 == 0]
        return (max(even) if even else max(cands)), vmem_limit

    # Ragged fallback: Pallas clamps the partial last block (rows are
    # independent and the masked output rows are never read) — still no
    # wrapper-side jnp.pad copy of the video tensor.
    return max(8, (int(target_rows) // 8) * 8), vmem_limit


# ----------------------------------------------------------------------------
# Wrapper
# ----------------------------------------------------------------------------
def avga_forward(audio, video, params, *, tb=None):
    """Pallas version of AVGA.forward. audio: (B,T,A), video: (B,T,N,V_DIM)."""
    w_aud, b_aud, w_vid, b_vid, w_v, w_g, w_h = params   # PyTorch Linear layouts
    B, T, N, V_DIM = video.shape
    A_DIM = audio.shape[-1]
    H = w_aud.shape[0]
    M = w_v.shape[0]
    assert N == M, "AVGA broadcast requires #spatial positions == map_size"
    BT = B * T

    auto_tb, vmem_limit = _choose_tile(BT, N, V_DIM)
    if tb is None:
        tb = auto_tb
    else:
        tb = int(tb)
        if tb != BT:
            tb = max(8, (min(tb, BT) // 8) * 8)   # sublane alignment
    grid_len = pl.cdiv(BT, tb)

    # Flatten (free XLA reshapes of contiguous HBM arrays; no copies).
    v2 = video.reshape(BT, N, V_DIM)
    a2 = audio.reshape(BT, A_DIM)

    cost = pl.CostEstimate(
        flops=int(2 * BT * N * (V_DIM * H + H * M + V_DIM)
                  + 2 * BT * (A_DIM * H + H * M)),
        transcendentals=int(BT * N * (M + 1)),
        bytes_accessed=int(4 * (BT * N * V_DIM + BT * A_DIM + BT * V_DIM)
                           + 2 * (V_DIM * H + H * M)
                           + 4 * (A_DIM * H + H * M + 2 * H + M)),
    )

    out = pl.pallas_call(
        avga_kernel,
        out_shape=jax.ShapeDtypeStruct((BT, V_DIM), jnp.float32),
        grid_spec=pltpu.PrefetchScalarGridSpec(
            num_scalar_prefetch=0,
            grid=(grid_len,),
            in_specs=[
                pl.BlockSpec((tb, N, V_DIM), lambda i: (i, 0, 0)),   # video block
                pl.BlockSpec((tb, A_DIM), lambda i: (i, 0)),         # audio block
                pl.BlockSpec((A_DIM, H), lambda i: (0, 0)),          # W_audio^T (f32)
                pl.BlockSpec((1, H), lambda i: (0, 0)),              # b_audio row
                pl.BlockSpec((V_DIM, H), lambda i: (0, 0)),          # W_video^T (bf16)
                pl.BlockSpec((1, H), lambda i: (0, 0)),              # b_video row
                pl.BlockSpec((H, M), lambda i: (0, 0)),              # W_v^T (bf16)
                pl.BlockSpec((H, M), lambda i: (0, 0)),              # W_g^T (f32)
                pl.BlockSpec((1, M), lambda i: (0, 0)),              # W_h (f32)
            ],
            out_specs=pl.BlockSpec((tb, V_DIM), lambda i: (i, 0)),   # lane-dense out
        ),
        compiler_params=pltpu.CompilerParams(
            dimension_semantics=("parallel",),
            vmem_limit_bytes=int(vmem_limit)),
        cost_estimate=cost,
    )(v2, a2,
      w_aud.T, b_aud.reshape(1, H),
      w_vid.T.astype(jnp.bfloat16), b_vid.reshape(1, H),
      w_v.T.astype(jnp.bfloat16), w_g.T, w_h.reshape(1, M))

    return out.reshape(B, T, V_DIM)


# ----------------------------------------------------------------------------
# Pure-JAX reference (f32 mirror of the PyTorch forward)
# ----------------------------------------------------------------------------
def avga_reference(audio, video, params):
    w_aud, b_aud, w_vid, b_vid, w_v, w_g, w_h = params
    B, T, N, V_DIM = video.shape
    v = video.reshape(B * T, N, V_DIM)
    a = audio.reshape(B * T, -1)
    v_t = jax.nn.relu(v @ w_vid.T + b_vid)                    # (BT, N, H)
    a_t = jax.nn.relu(a @ w_aud.T + b_aud)                    # (BT, H)
    content = v_t @ w_v.T + (a_t @ w_g.T)[:, :, None]         # (BT,N,M)+(BT,M,1)
    z = (jnp.tanh(content) @ w_h.T)[..., 0]                   # (BT, N)
    alpha = jax.nn.softmax(z, axis=-1)                        # (BT, N)
    c = jnp.einsum('bn,bnd->bd', alpha, v)                    # (BT, V_DIM)
    return c.reshape(B, T, V_DIM)


def xavier_uniform(key, shape):
    fan_out, fan_in = shape
    bound = jnp.sqrt(6.0 / (fan_in + fan_out))
    return jax.random.uniform(key, shape, jnp.float32, -bound, bound)


if __name__ == "__main__":
    # Small shapes consistent with the forward pass (M = map_size = #positions).
    B, T = 2, 8
    A_DIM, V_DIM, H, M = 32, 128, 64, 8
    N = M

    key = jax.random.PRNGKey(0)
    k = jax.random.split(key, 9)

    # Deterministic parameter init (torch Linear layouts: weight (out, in)).
    w_aud = xavier_uniform(k[0], (H, A_DIM))
    b_aud = jax.random.uniform(k[1], (H,), jnp.float32, -0.1, 0.1)
    w_vid = xavier_uniform(k[2], (H, V_DIM))
    b_vid = jax.random.uniform(k[3], (H,), jnp.float32, -0.1, 0.1)
    w_v = xavier_uniform(k[4], (M, H))
    w_g = xavier_uniform(k[5], (M, H))
    w_h = xavier_uniform(k[6], (1, M))
    params = (w_aud, b_aud, w_vid, b_vid, w_v, w_g, w_h)

    audio = jax.random.normal(k[7], (B, T, A_DIM), jnp.float32)
    video = jax.random.normal(k[8], (B, T, N, V_DIM), jnp.float32)

    out = avga_forward(audio, video, params)   # auto tb: BT=16 -> tb=8, 2 steps
    out = jax.block_until_ready(out)

    ref = avga_reference(audio, video, params)
    assert out.shape == (B, T, V_DIM), out.shape

    # bf16 GEMMs + approx reciprocal relax exact f32 parity; check loose
    # elementwise agreement plus a tight relative-L2 bound.
    max_err = float(jnp.max(jnp.abs(out - ref)))
    rel_l2 = float(jnp.linalg.norm(out - ref) / jnp.linalg.norm(ref))
    assert max_err < 1e-1, (max_err, rel_l2)
    assert rel_l2 < 5e-2, (max_err, rel_l2)

    print("KERNEL_OK")
</pallas_src>

<mosaic_0001>
module attributes {stable_mosaic.version = 11 : i64} {
  func.func @avga_kernel(%arg0: i32, %arg1: memref<8x8x128xf32, #tpu.memory_space<vmem>>, %arg2: memref<8x32xf32, #tpu.memory_space<vmem>>, %arg3: memref<32x64xf32, #tpu.memory_space<vmem>>, %arg4: memref<1x64xf32, #tpu.memory_space<vmem>>, %arg5: memref<128x64xbf16, #tpu.memory_space<vmem>>, %arg6: memref<1x64xf32, #tpu.memory_space<vmem>>, %arg7: memref<64x8xbf16, #tpu.memory_space<vmem>>, %arg8: memref<64x8xf32, #tpu.memory_space<vmem>>, %arg9: memref<1x8xf32, #tpu.memory_space<vmem>>, %arg10: memref<8x128xf32, #tpu.memory_space<vmem>>) attributes {dimension_semantics = [#tpu.dimension_semantics<parallel>], iteration_bounds = array<i64: 2>, scalar_prefetch = 0 : i64, scratch_operands = 0 : i64, tpu.core_type = #tpu.core_type<tc>, window_params = [{transform_indices = @transform_0, window_bounds = array<i64: 8, 8, 128>}, {transform_indices = @transform_1, window_bounds = array<i64: 8, 32>}, {pipeline_mode = #tpu.pipeline_mode<synchronous>, transform_indices = @transform_2, window_bounds = array<i64: 32, 64>}, {pipeline_mode = #tpu.pipeline_mode<synchronous>, transform_indices = @transform_3, window_bounds = array<i64: 1, 64>}, {pipeline_mode = #tpu.pipeline_mode<synchronous>, transform_indices = @transform_4, window_bounds = array<i64: 128, 64>}, {pipeline_mode = #tpu.pipeline_mode<synchronous>, transform_indices = @transform_5, window_bounds = array<i64: 1, 64>}, {pipeline_mode = #tpu.pipeline_mode<synchronous>, transform_indices = @transform_6, window_bounds = array<i64: 64, 8>}, {pipeline_mode = #tpu.pipeline_mode<synchronous>, transform_indices = @transform_7, window_bounds = array<i64: 64, 8>}, {pipeline_mode = #tpu.pipeline_mode<synchronous>, transform_indices = @transform_8, window_bounds = array<i64: 1, 8>}, {transform_indices = @transform_9, window_bounds = array<i64: 8, 128>}]} {
    %c0 = arith.constant 0 : index
    %c0_0 = arith.constant 0 : index
    %0 = vector.load %arg2[%c0, %c0_0] : memref<8x32xf32, #tpu.memory_space<vmem>>, vector<8x32xf32>
    %c0_1 = arith.constant 0 : index
    %c0_2 = arith.constant 0 : index
    %1 = vector.load %arg3[%c0_1, %c0_2] : memref<32x64xf32, #tpu.memory_space<vmem>>, vector<32x64xf32>
    %cst = arith.constant dense<0.000000e+00> : vector<8x64xf32>
    %2 = tpu.matmul %0, %1, %cst {dimension_numbers = #tpu.dot_dimension_numbers<[1], [0], [0], [1], [0, 0, 1, 1], [], []>} : vector<8x32xf32>, vector<32x64xf32>, vector<8x64xf32> -> vector<8x64xf32>
    %c0_3 = arith.constant 0 : index
    %c0_4 = arith.constant 0 : index
    %3 = vector.load %arg4[%c0_3, %c0_4] : memref<1x64xf32, #tpu.memory_space<vmem>>, vector<1x64xf32>
    %4 = vector.broadcast %3 : vector<1x64xf32> to vector<8x64xf32>
    %5 = arith.addf %2, %4 : vector<8x64xf32>
    %cst_5 = arith.constant 0.000000e+00 : f32
    %6 = vector.broadcast %cst_5 : f32 to vector<8x64xf32>
    %7 = arith.maximumf %5, %6 : vector<8x64xf32>
    %c0_6 = arith.constant 0 : index
    %c0_7 = arith.constant 0 : index
    %8 = vector.load %arg8[%c0_6, %c0_7] : memref<64x8xf32, #tpu.memory_space<vmem>>, vector<64x8xf32>
    %cst_8 = arith.constant dense<0.000000e+00> : vector<8x8xf32>
    %9 = tpu.matmul %7, %8, %cst_8 {dimension_numbers = #tpu.dot_dimension_numbers<[1], [0], [0], [1], [0, 0, 1, 1], [], []>} : vector<8x64xf32>, vector<64x8xf32>, vector<8x8xf32> -> vector<8x8xf32>
    %c0_9 = arith.constant 0 : index
    %c0_10 = arith.constant 0 : index
    %c0_11 = arith.constant 0 : index
    %10 = vector.load %arg1[%c0_9, %c0_10, %c0_11] : memref<8x8x128xf32, #tpu.memory_space<vmem>>, vector<8x8x128xf32>
    %11 = vector.shape_cast %10 : vector<8x8x128xf32> to vector<64x128xf32>
    %12 = arith.truncf %11 : vector<64x128xf32> to vector<64x128xbf16>
    %c0_12 = arith.constant 0 : index
    %c0_13 = arith.constant 0 : index
    %13 = vector.load %arg5[%c0_12, %c0_13] : memref<128x64xbf16, #tpu.memory_space<vmem>>, vector<128x64xbf16>
    %cst_14 = arith.constant dense<0.000000e+00> : vector<64x64xf32>
    %14 = tpu.matmul %12, %13, %cst_14 {dimension_numbers = #tpu.dot_dimension_numbers<[1], [0], [0], [1], [0, 0, 1, 1], [], []>} : vector<64x128xbf16>, vector<128x64xbf16>, vector<64x64xf32> -> vector<64x64xf32>
    %c0_15 = arith.constant 0 : index
    %c0_16 = arith.constant 0 : index
    %15 = vector.load %arg6[%c0_15, %c0_16] : memref<1x64xf32, #tpu.memory_space<vmem>>, vector<1x64xf32>
    %16 = vector.broadcast %15 : vector<1x64xf32> to vector<64x64xf32>
    %17 = arith.addf %14, %16 : vector<64x64xf32>
    %cst_17 = arith.constant 0.000000e+00 : f32
    %18 = vector.broadcast %cst_17 : f32 to vector<64x64xf32>
    %19 = arith.maximumf %17, %18 : vector<64x64xf32>
    %20 = arith.truncf %19 : vector<64x64xf32> to vector<64x64xbf16>
    %c0_18 = arith.constant 0 : index
    %c0_19 = arith.constant 0 : index
    %21 = vector.load %arg7[%c0_18, %c0_19] : memref<64x8xbf16, #tpu.memory_space<vmem>>, vector<64x8xbf16>
    %cst_20 = arith.constant dense<0.000000e+00> : vector<64x8xf32>
    %22 = tpu.matmul %20, %21, %cst_20 {dimension_numbers = #tpu.dot_dimension_numbers<[1], [0], [0], [1], [0, 0, 1, 1], [], []>} : vector<64x64xbf16>, vector<64x8xbf16>, vector<64x8xf32> -> vector<64x8xf32>
    %23 = vector.shape_cast %22 : vector<64x8xf32> to vector<8x8x8xf32>
    %24 = vector.shape_cast %9 : vector<8x8xf32> to vector<8x8x1xf32>
    %25 = vector.broadcast %24 : vector<8x8x1xf32> to vector<8x8x8xf32>
    %26 = arith.addf %23, %25 : vector<8x8x8xf32>
    %27 = math.tanh %26 : vector<8x8x8xf32>
    %c0_21 = arith.constant 0 : index
    %c0_22 = arith.constant 0 : index
    %28 = vector.load %arg9[%c0_21, %c0_22] : memref<1x8xf32, #tpu.memory_space<vmem>>, vector<1x8xf32>
    %29 = vector.shape_cast %28 : vector<1x8xf32> to vector<1x1x8xf32>
    %30 = vector.broadcast %29 : vector<1x1x8xf32> to vector<8x8x8xf32>
    %31 = arith.mulf %27, %30 : vector<8x8x8xf32>
    %cst_23 = arith.constant dense<0.000000e+00> : vector<8x8xf32>
    %32 = vector.multi_reduction <add>, %31, %cst_23 [2] : vector<8x8x8xf32> to vector<8x8xf32>
    %cst_24 = arith.constant dense<0xFF800000> : vector<8xf32>
    %33 = vector.multi_reduction <maximumf>, %32, %cst_24 [1] : vector<8x8xf32> to vector<8xf32>
    %34 = vector.shape_cast %33 : vector<8xf32> to vector<8x1xf32>
    %35 = vector.broadcast %34 : vector<8x1xf32> to vector<8x8xf32>
    %36 = arith.subf %32, %35 : vector<8x8xf32>
    %37 = math.exp %36 : vector<8x8xf32>
    %cst_25 = arith.constant dense<0.000000e+00> : vector<8xf32>
    %38 = vector.multi_reduction <add>, %37, %cst_25 [1] : vector<8x8xf32> to vector<8xf32>
    %39 = vector.shape_cast %38 : vector<8xf32> to vector<8x1xf32>
    %40 = tpu.reciprocal %39 {approx = true} : vector<8x1xf32> -> vector<8x1xf32>
    %41 = vector.broadcast %40 : vector<8x1xf32> to vector<8x8xf32>
    %42 = arith.mulf %37, %41 : vector<8x8xf32>
    %c0_26 = arith.constant 0 : index
    %c0_27 = arith.constant 0 : index
    %c0_28 = arith.constant 0 : index
    %43 = vector.load %arg1[%c0_26, %c0_27, %c0_28] : memref<8x8x128xf32, #tpu.memory_space<vmem>>, vector<8x8x128xf32>
    %44 = vector.shape_cast %42 : vector<8x8xf32> to vector<8x8x1xf32>
    %45 = vector.broadcast %44 : vector<8x8x1xf32> to vector<8x8x128xf32>
    %46 = arith.mulf %43, %45 : vector<8x8x128xf32>
    %cst_29 = arith.constant dense<0.000000e+00> : vector<8x128xf32>
    %47 = vector.multi_reduction <add>, %46, %cst_29 [1] : vector<8x8x128xf32> to vector<8x128xf32>
    %c0_30 = arith.constant 0 : index
    %c0_31 = arith.constant 0 : index
    %48 = vector.load %arg10[%c0_30, %c0_31] : memref<8x128xf32, #tpu.memory_space<vmem>>, vector<8x128xf32>
    tpu.vector_store %arg10[%c0_30, %c0_31], %47 {strides = array<i32>} : memref<8x128xf32, #tpu.memory_space<vmem>>, vector<8x128xf32>,
    return
  }
  func.func @transform_0(%arg0: i32) -> (i32, i32, i32) {
    %c0_i32 = arith.constant 0 : i32
    %c0_i32_0 = arith.constant 0 : i32
    %c0_i32_1 = arith.constant 0 : i32
    return %arg0, %c0_i32, %c0_i32_0 : i32, i32, i32
  }
  func.func @transform_1(%arg0: i32) -> (i32, i32) {
    %c0_i32 = arith.constant 0 : i32
    %c0_i32_0 = arith.constant 0 : i32
    return %arg0, %c0_i32 : i32, i32
  }
  func.func @transform_2(%arg0: i32) -> (i32, i32) {
    %c0_i32 = arith.constant 0 : i32
    %c0_i32_0 = arith.constant 0 : i32
    %c0_i32_1 = arith.constant 0 : i32
    return %c0_i32, %c0_i32_0 : i32, i32
  }
  func.func @transform_3(%arg0: i32) -> (i32, i32) {
    %c0_i32 = arith.constant 0 : i32
    %c0_i32_0 = arith.constant 0 : i32
    %c0_i32_1 = arith.constant 0 : i32
    return %c0_i32, %c0_i32_0 : i32, i32
  }
  func.func @transform_4(%arg0: i32) -> (i32, i32) {
    %c0_i32 = arith.constant 0 : i32
    %c0_i32_0 = arith.constant 0 : i32
    %c0_i32_1 = arith.constant 0 : i32
    return %c0_i32, %c0_i32_0 : i32, i32
  }
  func.func @transform_5(%arg0: i32) -> (i32, i32) {
    %c0_i32 = arith.constant 0 : i32
    %c0_i32_0 = arith.constant 0 : i32
    %c0_i32_1 = arith.constant 0 : i32
    return %c0_i32, %c0_i32_0 : i32, i32
  }
  func.func @transform_6(%arg0: i32) -> (i32, i32) {
    %c0_i32 = arith.constant 0 : i32
    %c0_i32_0 = arith.constant 0 : i32
    %c0_i32_1 = arith.constant 0 : i32
    return %c0_i32, %c0_i32_0 : i32, i32
  }
  func.func @transform_7(%arg0: i32) -> (i32, i32) {
    %c0_i32 = arith.constant 0 : i32
    %c0_i32_0 = arith.constant 0 : i32
    %c0_i32_1 = arith.constant 0 : i32
    return %c0_i32, %c0_i32_0 : i32, i32
  }
  func.func @transform_8(%arg0: i32) -> (i32, i32) {
    %c0_i32 = arith.constant 0 : i32
    %c0_i32_0 = arith.constant 0 : i32
    %c0_i32_1 = arith.constant 0 : i32
    return %c0_i32, %c0_i32_0 : i32, i32
  }
  func.func @transform_9(%arg0: i32) -> (i32, i32) {
    %c0_i32 = arith.constant 0 : i32
    %c0_i32_0 = arith.constant 0 : i32
    return %arg0, %c0_i32 : i32, i32
  }
}

</mosaic_0001>

<llo_original>
// kernel: tpu_custom_call.1
$region0: #{tpu_custom_call.1}
  #allocation0 [shape = 'u32[]', space=smem, size = 0x4, offset = 0x4, fixed_abs, tag = 'smem constant byte address 0x4 - core index']
  #allocation1 [shape = 'u32[144,128]{1,0:T(1,128)}', space=vmem, size = 0x12000, scoped, tag = 'internal scratch']
  %s0 = inlined_call_operand.vmem [shape: f32[16,8,128], index: 0, kind: input, shape index: {}]
  %s1 = inlined_call_operand.vmem [shape: f32[16,32], index: 1, kind: input, shape index: {}]
  %s2 = inlined_call_operand.vmem [shape: f32[32,64], index: 2, kind: input, shape index: {}]
  %s3 = inlined_call_operand.vmem [shape: f32[1,64], index: 3, kind: input, shape index: {}]
  %s4 = inlined_call_operand.vmem [shape: bf16[128,64], index: 4, kind: input, shape index: {}]
  %s5 = inlined_call_operand.vmem [shape: f32[1,64], index: 5, kind: input, shape index: {}]
  %s6 = inlined_call_operand.vmem [shape: bf16[64,8], index: 6, kind: input, shape index: {}]
  %s7 = inlined_call_operand.vmem [shape: f32[64,8], index: 7, kind: input, shape index: {}]
  %s8 = inlined_call_operand.vmem [shape: f32[1,8], index: 8, kind: input, shape index: {}]
  %s9 = inlined_call_operand.hbm [shape: f32[16,128], index: 9, kind: output, shape index: {}]
  %s10 = sld [smem:[#allocation0]]
  $region69: #{tpu_custom_call.1} parent=0
    _
  %s12 = ssub.s32 1, %s10
  %s13 = scalar_select 0, %s12, %s10
  $region1: #{tpu_custom_call.1} parent=0
    #allocation2 [shape = 'u8[8192]{0}', space=vmem, size = 0x2000, scoped, tag = 'output window, operand 0']
    #allocation3 [shape = 's32[2]{0}', space=sflag, size = 0x8, scoped, tag = 'scoped memory for tpu_custom_call.1']
    %14 = vsyncpa [#allocation3], 0
    %s15 = scalar_lea.sflag [#allocation3], 1
    %16 = vsyncpa %s15, 0
    loop: start=0, step=1, limit=4
    $region2: #{tpu_custom_call.1} parent=1 // loop_pre_header
      _
    $region3: #{tpu_custom_call.1} parent=1 // loop_header
      %s18 = sphi 0, %s22
      %p19 = scmp.ge.s32.totalorder %s18, 4
      %s28 = sphi 0, %s30
      %s31 = sphi 0, %s28
      %s32 = sphi 0, %s31
      %s48 = sphi 0, %s32
      %s54 = sphi 0, %s56
      %s57 = sphi 0, %s54
      %s58 = sphi 0, %s57
      %s74 = sphi 0, %s58
      %s78 = sphi 0, %s78
      %s80 = sphi 0, %s78
      %s81 = sphi 0, %s80
      %s95 = sphi 0, %s81
      %s99 = sphi 0, %s99
      %s101 = sphi 0, %s99
      %s102 = sphi 0, %s101
      %s116 = sphi 0, %s102
      %s120 = sphi 0, %s120
      %s122 = sphi 0, %s120
      %s123 = sphi 0, %s122
      %s137 = sphi 0, %s123
      %s141 = sphi 0, %s141
      %s143 = sphi 0, %s141
      %s144 = sphi 0, %s143
      %s158 = sphi 0, %s144
      %s162 = sphi 0, %s162
      %s164 = sphi 0, %s162
      %s165 = sphi 0, %s164
      %s179 = sphi 0, %s165
      %s183 = sphi 0, %s183
      %s185 = sphi 0, %s183
      %s186 = sphi 0, %s185
      %s200 = sphi 0, %s186
      %s204 = sphi 0, %s204
      %s206 = sphi 0, %s204
      %s207 = sphi 0, %s206
      %s221 = sphi 0, %s207
      %s227 = sphi 0, %s229
      %s230 = sphi 0, %s227
      %s231 = sphi 0, %s230
      %s247 = sphi 0, %s231
    $region4: #{tpu_custom_call.1} parent=1 // loop_header_branch
      %21 = sbr.rel (%p19) target = $region8
    $region5: #{tpu_custom_call.1} parent=1 // loop_body
      %s23 = ssub.s32 %s18, 1
      %s24 = ssub.s32 %s18, 2
      %s25 = sadd.s32 %s18, 1
      %s26 = ssub.s32 %s18, %s25
      %p27 = scmp.eq.s32.totalorder %s26, 0
      %s29 = sadd.s32 %s28, 1
      %s30 = scalar_select %p27, %s28, %s29
      %p33 = pneg %p27
      %p34 = scmp.eq.s32.totalorder %s18, 1
      %p35 = por %p33, %p34
      %p36 = scmp.ne.s32.totalorder %s28, %s31
      %p37 = scmp.eq.s32.totalorder %s18, 0
      %p38 = por %p36, %p37
      %p39 = scmp.ne.s32.totalorder %s28, %s31
      %p40 = scmp.eq.s32.totalorder %s23, 1
      %p41 = por %p39, %p40
      %p42 = scmp.ne.s32.totalorder %s31, %s32
      %p43 = scmp.eq.s32.totalorder %s23, 0
      %p44 = por %p42, %p43
      %p45 = scmp.ne.s32.totalorder %s31, %s32
      %p46 = scmp.eq.s32.totalorder %s24, 1
      %p47 = por %p45, %p46
      %p49 = scmp.ne.s32.totalorder %s32, %s48
      %p50 = scmp.eq.s32.totalorder %s24, 0
      %p51 = por %p49, %p50
      %s52 = ssub.s32 %s18, %s25
      %p53 = scmp.eq.s32.totalorder %s52, 0
      %s55 = sadd.s32 %s54, 1
      %s56 = scalar_select %p53, %s54, %s55
      %p59 = pneg %p53
      %p60 = scmp.eq.s32.totalorder %s18, 1
      %p61 = por %p59, %p60
      %p62 = scmp.ne.s32.totalorder %s54, %s57
      %p63 = scmp.eq.s32.totalorder %s18, 0
      %p64 = por %p62, %p63
      %p65 = scmp.ne.s32.totalorder %s54, %s57
      %p66 = scmp.eq.s32.totalorder %s23, 1
      %p67 = por %p65, %p66
      %p68 = scmp.ne.s32.totalorder %s57, %s58
      %p69 = scmp.eq.s32.totalorder %s23, 0
      %p70 = por %p68, %p69
      %p71 = scmp.ne.s32.totalorder %s57, %s58
      %p72 = scmp.eq.s32.totalorder %s24, 1
      %p73 = por %p71, %p72
      %p75 = scmp.ne.s32.totalorder %s58, %s74
      %p76 = scmp.eq.s32.totalorder %s24, 0
      %p77 = por %p75, %p76
      %s79 = sadd.s32 %s78, 1
      %p82 = scmp.eq.s32.totalorder %s18, 1
      %p83 = scmp.ne.s32.totalorder %s78, %s80
      %p84 = scmp.eq.s32.totalorder %s18, 0
      %p85 = por %p83, %p84
      %p86 = scmp.ne.s32.totalorder %s78, %s80
      %p87 = scmp.eq.s32.totalorder %s23, 1
      %p88 = por %p86, %p87
      %p89 = scmp.ne.s32.totalorder %s80, %s81
      %p90 = scmp.eq.s32.totalorder %s23, 0
      %p91 = por %p89, %p90
      %p92 = scmp.ne.s32.totalorder %s80, %s81
      %p93 = scmp.eq.s32.totalorder %s24, 1
      %p94 = por %p92, %p93
      %p96 = scmp.ne.s32.totalorder %s81, %s95
      %p97 = scmp.eq.s32.totalorder %s24, 0
      %p98 = por %p96, %p97
      %s100 = sadd.s32 %s99, 1
      %p103 = scmp.eq.s32.totalorder %s18, 1
      %p104 = scmp.ne.s32.totalorder %s99, %s101
      %p105 = scmp.eq.s32.totalorder %s18, 0
      %p106 = por %p104, %p105
      %p107 = scmp.ne.s32.totalorder %s99, %s101
      %p108 = scmp.eq.s32.totalorder %s23, 1
      %p109 = por %p107, %p108
      %p110 = scmp.ne.s32.totalorder %s101, %s102
      %p111 = scmp.eq.s32.totalorder %s23, 0
      %p112 = por %p110, %p111
      %p113 = scmp.ne.s32.totalorder %s101, %s102
      %p114 = scmp.eq.s32.totalorder %s24, 1
      %p115 = por %p113, %p114
      %p117 = scmp.ne.s32.totalorder %s102, %s116
      %p118 = scmp.eq.s32.totalorder %s24, 0
      %p119 = por %p117, %p118
      %s121 = sadd.s32 %s120, 1
      %p124 = scmp.eq.s32.totalorder %s18, 1
      %p125 = scmp.ne.s32.totalorder %s120, %s122
      %p126 = scmp.eq.s32.totalorder %s18, 0
      %p127 = por %p125, %p126
      %p128 = scmp.ne.s32.totalorder %s120, %s122
      %p129 = scmp.eq.s32.totalorder %s23, 1
      %p130 = por %p128, %p129
      %p131 = scmp.ne.s32.totalorder %s122, %s123
      %p132 = scmp.eq.s32.totalorder %s23, 0
      %p133 = por %p131, %p132
      %p134 = scmp.ne.s32.totalorder %s122, %s123
      %p135 = scmp.eq.s32.totalorder %s24, 1
      %p136 = por %p134, %p135
      %p138 = scmp.ne.s32.totalorder %s123, %s137
      %p139 = scmp.eq.s32.totalorder %s24, 0
      %p140 = por %p138, %p139
      %s142 = sadd.s32 %s141, 1
      %p145 = scmp.eq.s32.totalorder %s18, 1
      %p146 = scmp.ne.s32.totalorder %s141, %s143
      %p147 = scmp.eq.s32.totalorder %s18, 0
      %p148 = por %p146, %p147
      %p149 = scmp.ne.s32.totalorder %s141, %s143
      %p150 = scmp.eq.s32.totalorder %s23, 1
      %p151 = por %p149, %p150
      %p152 = scmp.ne.s32.totalorder %s143, %s144
      %p153 = scmp.eq.s32.totalorder %s23, 0
      %p154 = por %p152, %p153
      %p155 = scmp.ne.s32.totalorder %s143, %s144
      %p156 = scmp.eq.s32.totalorder %s24, 1
      %p157 = por %p155, %p156
      %p159 = scmp.ne.s32.totalorder %s144, %s158
      %p160 = scmp.eq.s32.totalorder %s24, 0
      %p161 = por %p159, %p160
      %s163 = sadd.s32 %s162, 1
      %p166 = scmp.eq.s32.totalorder %s18, 1
      %p167 = scmp.ne.s32.totalorder %s162, %s164
      %p168 = scmp.eq.s32.totalorder %s18, 0
      %p169 = por %p167, %p168
      %p170 = scmp.ne.s32.totalorder %s162, %s164
      %p171 = scmp.eq.s32.totalorder %s23, 1
      %p172 = por %p170, %p171
      %p173 = scmp.ne.s32.totalorder %s164, %s165
      %p174 = scmp.eq.s32.totalorder %s23, 0
      %p175 = por %p173, %p174
      %p176 = scmp.ne.s32.totalorder %s164, %s165
      %p177 = scmp.eq.s32.totalorder %s24, 1
      %p178 = por %p176, %p177
      %p180 = scmp.ne.s32.totalorder %s165, %s179
      %p181 = scmp.eq.s32.totalorder %s24, 0
      %p182 = por %p180, %p181
      %s184 = sadd.s32 %s183, 1
      %p187 = scmp.eq.s32.totalorder %s18, 1
      %p188 = scmp.ne.s32.totalorder %s183, %s185
      %p189 = scmp.eq.s32.totalorder %s18, 0
      %p190 = por %p188, %p189
      %p191 = scmp.ne.s32.totalorder %s183, %s185
      %p192 = scmp.eq.s32.totalorder %s23, 1
      %p193 = por %p191, %p192
      %p194 = scmp.ne.s32.totalorder %s185, %s186
      %p195 = scmp.eq.s32.totalorder %s23, 0
      %p196 = por %p194, %p195
      %p197 = scmp.ne.s32.totalorder %s185, %s186
      %p198 = scmp.eq.s32.totalorder %s24, 1
      %p199 = por %p197, %p198
      %p201 = scmp.ne.s32.totalorder %s186, %s200
      %p202 = scmp.eq.s32.totalorder %s24, 0
      %p203 = por %p201, %p202
      %s205 = sadd.s32 %s204, 1
      %p208 = scmp.eq.s32.totalorder %s18, 1
      %p209 = scmp.ne.s32.totalorder %s204, %s206
      %p210 = scmp.eq.s32.totalorder %s18, 0
      %p211 = por %p209, %p210
      %p212 = scmp.ne.s32.totalorder %s204, %s206
      %p213 = scmp.eq.s32.totalorder %s23, 1
      %p214 = por %p212, %p213
      %p215 = scmp.ne.s32.totalorder %s206, %s207
      %p216 = scmp.eq.s32.totalorder %s23, 0
      %p217 = por %p215, %p216
      %p218 = scmp.ne.s32.totalorder %s206, %s207
      %p219 = scmp.eq.s32.totalorder %s24, 1
      %p220 = por %p218, %p219
      %p222 = scmp.ne.s32.totalorder %s207, %s221
      %p223 = scmp.eq.s32.totalorder %s24, 0
      %p224 = por %p222, %p223
      %s225 = ssub.s32 %s18, %s25
      %p226 = scmp.eq.s32.totalorder %s225, 0
      %s228 = sadd.s32 %s227, 1
      %s229 = scalar_select %p226, %s227, %s228
      %p232 = pneg %p226
      %p233 = scmp.eq.s32.totalorder %s18, 1
      %p234 = por %p232, %p233
      %p235 = scmp.ne.s32.totalorder %s227, %s230
      %p236 = scmp.eq.s32.totalorder %s18, 0
      %p237 = por %p235, %p236
      %p238 = scmp.ne.s32.totalorder %s227, %s230
      %p239 = scmp.eq.s32.totalorder %s23, 1
      %p240 = por %p238, %p239
      %p241 = scmp.ne.s32.totalorder %s230, %s231
      %p242 = scmp.eq.s32.totalorder %s23, 0
      %p243 = por %p241, %p242
      %p244 = scmp.ne.s32.totalorder %s230, %s231
      %p245 = scmp.eq.s32.totalorder %s24, 1
      %p246 = por %p244, %p245
      %p248 = scmp.ne.s32.totalorder %s231, %s247
      %p249 = scmp.eq.s32.totalorder %s24, 0
      %p250 = por %p248, %p249
      %p251 = scmp.le.s32.totalorder 1, %s18
      %p252 = scmp.lt.s32.totalorder %s18, 3
      %p253 = pnand %p251, %p252
      %p254 = pneg %p253
      // Predicated region
      $region9: #{tpu_custom_call.1} parent=5 // pred_check
        _
      $region10: #{tpu_custom_call.1} parent=5 // pred_check_branch
        %256 = sbr.rel (%p253) target = $region12
      $region11: #{tpu_custom_call.1} parent=5 // pred_region
        %s257 = ssub.s32 %s18, 1
        // Predicated region
        $region13: #{tpu_custom_call.1} parent=11 // pred_check
          %p258 = pneg %p91
        $region14: #{tpu_custom_call.1} parent=11 // pred_check_branch
          %260 = sbr.rel (%p258) target = $region16
        $region15: #{tpu_custom_call.1} parent=11 // pred_region
          _
        $region16: #{tpu_custom_call.1} parent=11 // pred_fallthru
          _
        // Predicated region
        $region17: #{tpu_custom_call.1} parent=11 // pred_check
          %p261 = pneg %p112
        $region18: #{tpu_custom_call.1} parent=11 // pred_check_branch
          %263 = sbr.rel (%p261) target = $region20
        $region19: #{tpu_custom_call.1} parent=11 // pred_region
          _
        $region20: #{tpu_custom_call.1} parent=11 // pred_fallthru
          _
        // Predicated region
        $region21: #{tpu_custom_call.1} parent=11 // pred_check
          %p264 = pneg %p133
        $region22: #{tpu_custom_call.1} parent=11 // pred_check_branch
          %266 = sbr.rel (%p264) target = $region24
        $region23: #{tpu_custom_call.1} parent=11 // pred_region
          _
        $region24: #{tpu_custom_call.1} parent=11 // pred_fallthru
          _
        // Predicated region
        $region25: #{tpu_custom_call.1} parent=11 // pred_check
          %p267 = pneg %p154
        $region26: #{tpu_custom_call.1} parent=11 // pred_check_branch
          %269 = sbr.rel (%p267) target = $region28
        $region27: #{tpu_custom_call.1} parent=11 // pred_region
          _
        $region28: #{tpu_custom_call.1} parent=11 // pred_fallthru
          _
        // Predicated region
        $region29: #{tpu_custom_call.1} parent=11 // pred_check
          %p270 = pneg %p175
        $region30: #{tpu_custom_call.1} parent=11 // pred_check_branch
          %272 = sbr.rel (%p270) target = $region32
        $region31: #{tpu_custom_call.1} parent=11 // pred_region
          _
        $region32: #{tpu_custom_call.1} parent=11 // pred_fallthru
          _
        // Predicated region
        $region33: #{tpu_custom_call.1} parent=11 // pred_check
          %p273 = pneg %p196
        $region34: #{tpu_custom_call.1} parent=11 // pred_check_branch
          %275 = sbr.rel (%p273) target = $region36
        $region35: #{tpu_custom_call.1} parent=11 // pred_region
          _
        $region36: #{tpu_custom_call.1} parent=11 // pred_fallthru
          _
        // Predicated region
        $region37: #{tpu_custom_call.1} parent=11 // pred_check
          %p276 = pneg %p217
        $region38: #{tpu_custom_call.1} parent=11 // pred_check_branch
          %278 = sbr.rel (%p276) target = $region40
        $region39: #{tpu_custom_call.1} parent=11 // pred_region
          _
        $region40: #{tpu_custom_call.1} parent=11 // pred_fallthru
          _
      $region12: #{tpu_custom_call.1} parent=5 // pred_fallthru
        _
      %p279 = scmp.lt.s32.totalorder %s18, 2
      // Predicated region
      $region41: #{tpu_custom_call.1} parent=5 // pred_check
        %p280 = pneg %p279
      $region42: #{tpu_custom_call.1} parent=5 // pred_check_branch
        %282 = sbr.rel (%p280) target = $region44
      $region43: #{tpu_custom_call.1} parent=5 // pred_region
        // Predicated region
        $region45: #{tpu_custom_call.1} parent=43 // pred_check
          %p283 = pneg %p38
        $region46: #{tpu_custom_call.1} parent=43 // pred_check_branch
          %285 = sbr.rel (%p283) target = $region48
        $region47: #{tpu_custom_call.1} parent=43 // pred_region
          %s286 = smul.u32 8, %s18
          %p287 = scmp.lt.s32.totalorder %s286, 15
          %s288 = scalar_select %p287, %s286, 15
          %s289 = smul.addr %s288, 8
          %s290 = scalar_lea.vmem %s0, %s289
          %s291 = smul.u32 8, %s18
        $region48: #{tpu_custom_call.1} parent=43 // pred_fallthru
          _
        // Predicated region
        $region49: #{tpu_custom_call.1} parent=43 // pred_check
          %p292 = pneg %p64
        $region50: #{tpu_custom_call.1} parent=43 // pred_check_branch
          %294 = sbr.rel (%p292) target = $region52
        $region51: #{tpu_custom_call.1} parent=43 // pred_region
          %p295 = scmp.lt.s32.totalorder %s18, 1
          %s296 = scalar_select %p295, %s18, 1
          %s297 = smul.addr %s296, 8
          %s298 = scalar_lea.vmem %s1, %s297
        $region52: #{tpu_custom_call.1} parent=43 // pred_fallthru
          _
      $region44: #{tpu_custom_call.1} parent=5 // pred_fallthru
        _
      %p299 = scmp.le.s32.totalorder 1, %s18
      %p300 = scmp.lt.s32.totalorder %s18, 3
      %p301 = pnand %p299, %p300
      %p302 = pneg %p301
      // Predicated region
      $region53: #{tpu_custom_call.1} parent=5 // pred_check
        _
      $region54: #{tpu_custom_call.1} parent=5 // pred_check_branch
        %304 = sbr.rel (%p301) target = $region56
      $region55: #{tpu_custom_call.1} parent=5 // pred_region
        %s305 = ssub.s32 %s18, 1
        %s306 = smul.u32 8, %s23
        %p307 = scmp.lt.s32.totalorder %s306, 15
        %s308 = scalar_select %p307, %s306, 15
        %s309 = smul.addr %s308, 8
        %s310 = scalar_lea.vmem %s0, %s309
        %p311 = pneg %p44
        %p312 = pneg %p41
        %p313 = scmp.lt.s32.totalorder %s23, 1
        %s314 = scalar_select %p313, %s23, 1
        %s315 = smul.addr %s314, 8
        %s316 = scalar_lea.vmem %s1, %s315
        %p317 = pneg %p70
        %p318 = pneg %p67
        %p319 = pneg %p91
        %p320 = pneg %p88
        %p321 = pneg %p112
        %p322 = pneg %p109
        %p323 = pneg %p133
        %p324 = pneg %p130
        %p325 = pneg %p154
        %p326 = pneg %p151
        %p327 = pneg %p175
        %p328 = pneg %p172
        %p329 = pneg %p196
        %p330 = pneg %p193
        %p331 = pneg %p217
        %p332 = pneg %p214
        %p333 = pneg %p243
        %p334 = pneg %p240
        %s335 = sand.u32 %s230, 1
        %s336 = scalar_lea.sflag [#allocation3], %s335
        %s337 = sand.u32 %s230, 1
        %s338 = smul.addr %s337, 8
        %s339 = scalar_lea.vmem [#allocation2], %s338
        %s340 = smul.u32 8, %s23
        %p341 = scmp.lt.s32.totalorder %s340, 15
        %s342 = scalar_select %p341, %s340, 15
        %s343 = smul.addr %s342, 8
        %s344 = scalar_lea.vmem %s0, %s343
        %s345 = smul.u32 8, %s23
        %p346 = scmp.lt.s32.totalorder %s23, 1
        %s347 = scalar_select %p346, %s23, 1
        %s348 = smul.addr %s347, 8
        %s349 = scalar_lea.vmem %s1, %s348
        %v351 = vld [vmem:[%s349] sm:$0xff]
        %v352 = vld [vmem:[%s2] sm:$0xff]
        %v353 = vld [vmem:[%s2 + $0x8] sm:$0xff]
        %v354 = vld [vmem:[%s2 + $0x10] sm:$0xff]
        %v355 = vld [vmem:[%s2 + $0x18] sm:$0xff]
        %v356 = vld [vmem:[%s3] sm:$0x1]
        %v358 = vlaneseq
        %v359 = vshrl.u32 %v358, 7
        %v360 = vsub.s32 0, %v359
        %v361 = vrot.slane %v356, %v360
        %vm363 = vcmask 261120
        %v365 = vsel %vm363, %v351, 0
        %367 = vmatprep.subr.mxu0 0.0
        %368 = vmatpush1.msra.mxu0 %v352
        %369 = vmatprep.subr.mxu0 0.0
        %370 = vmatpush1.msra.mxu0 %v353
        %371 = vmatprep.subr.mxu0 0.0
        %372 = vmatpush1.msra.mxu0 %v354
        %373 = vmatprep.subr.mxu0 0.0
        %374 = vmatpush1.msra.mxu0 %v355
        %375 = vmatprep.subr.mxu0 0.0
        %376 = vmatpush1.msra.mxu0 0.0
        %377 = vmatprep.subr.mxu0 0.0
        %378 = vmatpush1.msra.mxu0 0.0
        %379 = vmatprep.subr.mxu0 0.0
        %380 = vmatpush1.msra.mxu0 0.0
        %381 = vmatprep.subr.mxu0 0.0
        %382 = vmatpush1.msra.mxu0 0.0
        %383 = vmatprep.subr.mxu0 0.0
        %384 = vmatpush1.msra.mxu0 0.0
        %385 = vmatprep.subr.mxu0 0.0
        %386 = vmatpush1.msra.mxu0 0.0
        %387 = vmatprep.subr.mxu0 0.0
        %388 = vmatpush1.msra.mxu0 0.0
        %389 = vmatprep.subr.mxu0 0.0
        %390 = vmatpush1.msra.mxu0 0.0
        %391 = vmatprep.subr.mxu0 0.0
        %392 = vmatpush1.msra.mxu0 0.0
        %393 = vmatprep.subr.mxu0 0.0
        %394 = vmatpush1.msra.mxu0 0.0
        %395 = vmatprep.subr.mxu0 0.0
        %396 = vmatpush1.msra.mxu0 0.0
        %397 = vmatprep.subr.mxu0 0.0
        %398 = vmatpush1.msra.mxu0 0.0
        %399 = vmatprep.subr.mxu0 0.0
        %400 = vmatpush1.msra.mxu0 0.0
        %401 = vmatprep.subr.mxu0 0.0
        %402 = vmatpush1.msra.mxu0 0.0
        %403 = vmatprep.subr.mxu0 0.0
        %404 = vmatpush1.msra.mxu0 0.0
        %405 = vmatprep.subr.mxu0 0.0
        %406 = vmatpush1.msra.mxu0 0.0
        %407 = vmatprep.subr.mxu0 0.0
        %408 = vmatpush1.msra.mxu0 0.0
        %409 = vmatprep.subr.mxu0 0.0
        %410 = vmatpush1.msra.mxu0 0.0
        %411 = vmatprep.subr.mxu0 0.0
        %412 = vmatpush1.msra.mxu0 0.0
        %413 = vmatprep.subr.mxu0 0.0
        %414 = vmatpush1.msra.mxu0 0.0
        %415 = vmatprep.subr.mxu0 0.0
        %416 = vmatpush1.msra.mxu0 0.0
        %417 = vmatprep.subr.mxu0 0.0
        %418 = vmatpush1.msra.mxu0 0.0
        %419 = vmatprep.subr.mxu0 0.0
        %420 = vmatpush1.msra.mxu0 0.0
        %421 = vmatprep.subr.mxu0 0.0
        %422 = vmatpush1.msra.mxu0 0.0
        %423 = vmatprep.subr.mxu0 0.0
        %424 = vmatpush1.msra.mxu0 0.0
        %425 = vmatprep.subr.mxu0 0.0
        %426 = vmatpush1.msra.mxu0 0.0
        %427 = vmatprep.subr.mxu0 0.0
        %428 = vmatpush1.msra.mxu0 0.0
        %429 = vmatprep.subr.mxu0 0.0
        %430 = vmatpush1.msra.mxu0 0.0
        %431 = vmatprep.mubr.f32.mxu0 0.0
        %432 = vmatmul.mubr.f32.gmra.mrb[0].mxu0 %v365
        %v433 = vpop.f32.mrb[0].mxu0
        %v434 = vadd.f32 %v361, %v433
        %v435 = vpop.f32.mrb[0].mxu0
        %436 = vdwg.mxu0
        %v437 = vmax.f32 %v434, 0.0
        %v438 = vld [vmem:[%s7] sm:$0xff]
        %v439 = vld [vmem:[%s7 + $0x8] sm:$0xff]
        %v440 = vld [vmem:[%s7 + $0x10] sm:$0xff]
        %v441 = vld [vmem:[%s7 + $0x18] sm:$0xff]
        %v442 = vld [vmem:[%s7 + $0x20] sm:$0xff]
        %v443 = vld [vmem:[%s7 + $0x28] sm:$0xff]
        %v444 = vld [vmem:[%s7 + $0x30] sm:$0xff]
        %v445 = vld [vmem:[%s7 + $0x38] sm:$0xff]
        %vm446 = vcmask 523264
        %v448 = vsel %vm446, %v437, 0
        %450 = vmatprep.subr.mxu0 0.0
        %451 = vmatpush1.msra.mxu0 %v438
        %452 = vmatprep.subr.mxu0 0.0
        %453 = vmatpush1.msra.mxu0 %v439
        %454 = vmatprep.subr.mxu0 0.0
        %455 = vmatpush1.msra.mxu0 %v440
        %456 = vmatprep.subr.mxu0 0.0
        %457 = vmatpush1.msra.mxu0 %v441
        %458 = vmatprep.subr.mxu0 0.0
        %459 = vmatpush1.msra.mxu0 %v442
        %460 = vmatprep.subr.mxu0 0.0
        %461 = vmatpush1.msra.mxu0 %v443
        %462 = vmatprep.subr.mxu0 0.0
        %463 = vmatpush1.msra.mxu0 %v444
        %464 = vmatprep.subr.mxu0 0.0
        %465 = vmatpush1.msra.mxu0 %v445
        %466 = vmatprep.subr.mxu0 0.0
        %467 = vmatpush1.msra.mxu0 0.0
        %468 = vmatprep.subr.mxu0 0.0
        %469 = vmatpush1.msra.mxu0 0.0
        %470 = vmatprep.subr.mxu0 0.0
        %471 = vmatpush1.msra.mxu0 0.0
        %472 = vmatprep.subr.mxu0 0.0
        %473 = vmatpush1.msra.mxu0 0.0
        %474 = vmatprep.subr.mxu0 0.0
        %475 = vmatpush1.msra.mxu0 0.0
        %476 = vmatprep.subr.mxu0 0.0
        %477 = vmatpush1.msra.mxu0 0.0
        %478 = vmatprep.subr.mxu0 0.0
        %479 = vmatpush1.msra.mxu0 0.0
        %480 = vmatprep.subr.mxu0 0.0
        %481 = vmatpush1.msra.mxu0 0.0
        %482 = vmatprep.subr.mxu0 0.0
        %483 = vmatpush1.msra.mxu0 0.0
        %484 = vmatprep.subr.mxu0 0.0
        %485 = vmatpush1.msra.mxu0 0.0
        %486 = vmatprep.subr.mxu0 0.0
        %487 = vmatpush1.msra.mxu0 0.0
        %488 = vmatprep.subr.mxu0 0.0
        %489 = vmatpush1.msra.mxu0 0.0
        %490 = vmatprep.subr.mxu0 0.0
        %491 = vmatpush1.msra.mxu0 0.0
        %492 = vmatprep.subr.mxu0 0.0
        %493 = vmatpush1.msra.mxu0 0.0
        %494 = vmatprep.subr.mxu0 0.0
        %495 = vmatpush1.msra.mxu0 0.0
        %496 = vmatprep.subr.mxu0 0.0
        %497 = vmatpush1.msra.mxu0 0.0
        %498 = vmatprep.subr.mxu0 0.0
        %499 = vmatpush1.msra.mxu0 0.0
        %500 = vmatprep.subr.mxu0 0.0
        %501 = vmatpush1.msra.mxu0 0.0
        %502 = vmatprep.subr.mxu0 0.0
        %503 = vmatpush1.msra.mxu0 0.0
        %504 = vmatprep.subr.mxu0 0.0
        %505 = vmatpush1.msra.mxu0 0.0
        %506 = vmatprep.subr.mxu0 0.0
        %507 = vmatpush1.msra.mxu0 0.0
        %508 = vmatprep.subr.mxu0 0.0
        %509 = vmatpush1.msra.mxu0 0.0
        %510 = vmatprep.subr.mxu0 0.0
        %511 = vmatpush1.msra.mxu0 0.0
        %512 = vmatprep.subr.mxu0 0.0
        %513 = vmatpush1.msra.mxu0 0.0
        %514 = vmatprep.mubr.f32.mxu0 0.0
        %515 = vmatmul.mubr.f32.gmra.mrb[0].mxu0 %v448
        %v516 = vpop.f32.mrb[0].mxu0
        %v517 = vadd.f32 0.0, %v516
        %v518 = vpop.f32.mrb[0].mxu0
        %519 = vdwg.mxu0
        %v520 = vld [vmem:[%s344] sm:$0xff]
        %v521 = vld [vmem:[%s344 + $0x8] sm:$0xff]
        %v522 = vld [vmem:[%s344 + $0x10] sm:$0xff]
        %v523 = vld [vmem:[%s344 + $0x18] sm:$0xff]
        %v524 = vld [vmem:[%s344 + $0x20] sm:$0xff]
        %v525 = vld [vmem:[%s344 + $0x28] sm:$0xff]
        %v526 = vld [vmem:[%s344 + $0x30] sm:$0xff]
        %v527 = vld [vmem:[%s344 + $0x38] sm:$0xff]
        %v528 = vpack.c.bf16 %v521, %v520
        %v529 = vpack.c.bf16 %v523, %v522
        %v530 = vpack.c.bf16 %v525, %v524
        %v531 = vpack.c.bf16 %v527, %v526
        %v532 = vld [vmem:[%s4] sm:$0xf]
        %v533 = vld [vmem:[%s4 + $0x4] sm:$0xf]
        %v534 = vld [vmem:[%s4 + $0x8] sm:$0xf]
        %v535 = vld [vmem:[%s4 + $0xc] sm:$0xf]
        %v536 = vld [vmem:[%s4 + $0x10] sm:$0xf]
        %v537 = vld [vmem:[%s4 + $0x14] sm:$0xf]
        %v538 = vld [vmem:[%s4 + $0x18] sm:$0xf]
        %v539 = vld [vmem:[%s4 + $0x1c] sm:$0xf]
        %v540 = vld [vmem:[%s4 + $0x20] sm:$0xf]
        %v541 = vld [vmem:[%s4 + $0x24] sm:$0xf]
        %v542 = vld [vmem:[%s4 + $0x28] sm:$0xf]
        %v543 = vld [vmem:[%s4 + $0x2c] sm:$0xf]
        %v544 = vld [vmem:[%s4 + $0x30] sm:$0xf]
        %v545 = vld [vmem:[%s4 + $0x34] sm:$0xf]
        %v546 = vld [vmem:[%s4 + $0x38] sm:$0xf]
        %v547 = vld [vmem:[%s4 + $0x3c] sm:$0xf]
        %v548 = vld [vmem:[%s5] sm:$0x1]
        %v550 = vlaneseq
        %v551 = vshrl.u32 %v550, 7
        %v552 = vsub.s32 0, %v551
        %v553 = vrot.slane %v548, %v552
        %v571 = vunpack.c.l.b16 %v532
        %v572 = vunpack.c.l.b16 %v533
        %v573 = vunpack.c.l.b16 %v534
        %v574 = vunpack.c.l.b16 %v535
        %v575 = vunpack.c.l.b16 %v536
        %v576 = vunpack.c.l.b16 %v537
        %v577 = vunpack.c.l.b16 %v538
        %v578 = vunpack.c.l.b16 %v539
        %v579 = vunpack.c.l.b16 %v540
        %v580 = vunpack.c.l.b16 %v541
        %v581 = vunpack.c.l.b16 %v542
        %v582 = vunpack.c.l.b16 %v543
        %v583 = vunpack.c.l.b16 %v544
        %v584 = vunpack.c.l.b16 %v545
        %v585 = vunpack.c.l.b16 %v546
        %v586 = vunpack.c.l.b16 %v547
        %v587 = vpack.c.b16 %v572, %v571
        %v588 = vpack.c.b16 %v574, %v573
        %v589 = vpack.c.b16 %v576, %v575
        %v590 = vpack.c.b16 %v578, %v577
        %v591 = vpack.c.b16 %v580, %v579
        %v592 = vpack.c.b16 %v582, %v581
        %v593 = vpack.c.b16 %v584, %v583
        %v594 = vpack.c.b16 %v586, %v585
        %603 = vmatprep.subr.bf16.mxu0 0
        %604 = vmatpush1.bf16.msra.mxu0 %v587
        %605 = vmatprep.subr.bf16.mxu0 0
        %606 = vmatpush1.bf16.msra.mxu0 %v588
        %607 = vmatprep.subr.bf16.mxu0 0
        %608 = vmatpush1.bf16.msra.mxu0 %v589
        %609 = vmatprep.subr.bf16.mxu0 0
        %610 = vmatpush1.bf16.msra.mxu0 %v590
        %611 = vmatprep.subr.bf16.mxu0 0
        %612 = vmatpush1.bf16.msra.mxu0 %v591
        %613 = vmatprep.subr.bf16.mxu0 0
        %614 = vmatpush1.bf16.msra.mxu0 %v592
        %615 = vmatprep.subr.bf16.mxu0 0
        %616 = vmatpush1.bf16.msra.mxu0 %v593
        %617 = vmatprep.subr.bf16.mxu0 0
        %618 = vmatpush1.bf16.msra.mxu0 %v594
        %619 = vmatprep.subr.bf16.mxu0 0
        %620 = vmatpush1.bf16.msra.mxu0 0
        %621 = vmatprep.subr.bf16.mxu0 0
        %622 = vmatpush1.bf16.msra.mxu0 0
        %623 = vmatprep.subr.bf16.mxu0 0
        %624 = vmatpush1.bf16.msra.mxu0 0
        %625 = vmatprep.subr.bf16.mxu0 0
        %626 = vmatpush1.bf16.msra.mxu0 0
        %627 = vmatprep.subr.bf16.mxu0 0
        %628 = vmatpush1.bf16.msra.mxu0 0
        %629 = vmatprep.subr.bf16.mxu0 0
        %630 = vmatpush1.bf16.msra.mxu0 0
        %631 = vmatprep.subr.bf16.mxu0 0
        %632 = vmatpush1.bf16.msra.mxu0 0
        %633 = vmatprep.subr.bf16.mxu0 0
        %634 = vmatpush1.bf16.msra.mxu0 0
        %635 = vmatprep.mubr.bf16.mxu0 0
        %636 = vmatmul.mubr.bf16.gmra.mrb[0].mxu0 %v528
        %v637 = vpop.f32.mrb[0].mxu0
        %v638 = vadd.f32 %v553, %v637
        %v639 = vpop.f32.mrb[0].mxu0
        %v640 = vpop.f32.mrb[0].mxu0
        %v641 = vadd.f32 %v553, %v640
        %v642 = vpop.f32.mrb[0].mxu0
        %643 = vmatprep.mubr.bf16.mxu0 0
        %644 = vmatmul.mubr.bf16.gmra.mrb[0].mxu0 %v529
        %v645 = vpop.f32.mrb[0].mxu0
        %v646 = vadd.f32 %v553, %v645
        %v647 = vpop.f32.mrb[0].mxu0
        %v648 = vpop.f32.mrb[0].mxu0
        %v649 = vadd.f32 %v553, %v648
        %v650 = vpop.f32.mrb[0].mxu0
        %651 = vmatprep.mubr.bf16.mxu0 0
        %652 = vmatmul.mubr.bf16.gmra.mrb[0].mxu0 %v530
        %v653 = vpop.f32.mrb[0].mxu0
        %v654 = vadd.f32 %v553, %v653
        %v655 = vpop.f32.mrb[0].mxu0
        %v656 = vpop.f32.mrb[0].mxu0
        %v657 = vadd.f32 %v553, %v656
        %v658 = vpop.f32.mrb[0].mxu0
        %659 = vmatprep.mubr.bf16.mxu0 0
        %660 = vmatmul.mubr.bf16.gmra.mrb[0].mxu0 %v531
        %v661 = vpop.f32.mrb[0].mxu0
        %v662 = vadd.f32 %v553, %v661
        %v663 = vpop.f32.mrb[0].mxu0
        %v664 = vpop.f32.mrb[0].mxu0
        %v665 = vadd.f32 %v553, %v664
        %v666 = vpop.f32.mrb[0].mxu0
        %667 = vdwg.mxu0
        %v668 = vmax.f32 %v638, 0.0
        %v669 = vmax.f32 %v641, 0.0
        %v670 = vmax.f32 %v646, 0.0
        %v671 = vmax.f32 %v649, 0.0
        %v672 = vmax.f32 %v654, 0.0
        %v673 = vmax.f32 %v657, 0.0
        %v674 = vmax.f32 %v662, 0.0
        %v675 = vmax.f32 %v665, 0.0
        %v676 = vpack.c.bf16 %v669, %v668
        %v677 = vpack.c.bf16 %v671, %v670
        %v678 = vpack.c.bf16 %v673, %v672
        %v679 = vpack.c.bf16 %v675, %v674
        %v680 = vld [vmem:[%s6] sm:$0xf]
        %v681 = vld [vmem:[%s6 + $0x4] sm:$0xf]
        %v682 = vld [vmem:[%s6 + $0x8] sm:$0xf]
        %v683 = vld [vmem:[%s6 + $0xc] sm:$0xf]
        %v684 = vld [vmem:[%s6 + $0x10] sm:$0xf]
        %v685 = vld [vmem:[%s6 + $0x14] sm:$0xf]
        %v686 = vld [vmem:[%s6 + $0x18] sm:$0xf]
        %v687 = vld [vmem:[%s6 + $0x1c] sm:$0xf]
        %v696 = vunpack.c.l.b16 %v680
        %v697 = vunpack.c.l.b16 %v681
        %v698 = vunpack.c.l.b16 %v682
        %v699 = vunpack.c.l.b16 %v683
        %v700 = vunpack.c.l.b16 %v684
        %v701 = vunpack.c.l.b16 %v685
        %v702 = vunpack.c.l.b16 %v686
        %v703 = vunpack.c.l.b16 %v687
        %v704 = vpack.c.b16 %v697, %v696
        %v705 = vpack.c.b16 %v699, %v698
        %v706 = vpack.c.b16 %v701, %v700
        %v707 = vpack.c.b16 %v703, %v702
        %v713 = vsel %vm446, %v676, 0
        %v716 = vsel %vm446, %v677, 0
        %v719 = vsel %vm446, %v678, 0
        %v722 = vsel %vm446, %v679, 0
        %724 = vmatprep.subr.bf16.mxu0 0
        %725 = vmatpush1.bf16.msra.mxu0 %v704
        %726 = vmatprep.subr.bf16.mxu0 0
        %727 = vmatpush1.bf16.msra.mxu0 %v705
        %728 = vmatprep.subr.bf16.mxu0 0
        %729 = vmatpush1.bf16.msra.mxu0 %v706
        %730 = vmatprep.subr.bf16.mxu0 0
        %731 = vmatpush1.bf16.msra.mxu0 %v707
        %732 = vmatprep.subr.bf16.mxu0 0
        %733 = vmatpush1.bf16.msra.mxu0 0
        %734 = vmatprep.subr.bf16.mxu0 0
        %735 = vmatpush1.bf16.msra.mxu0 0
        %736 = vmatprep.subr.bf16.mxu0 0
        %737 = vmatpush1.bf16.msra.mxu0 0
        %738 = vmatprep.subr.bf16.mxu0 0
        %739 = vmatpush1.bf16.msra.mxu0 0
        %740 = vmatprep.subr.bf16.mxu0 0
        %741 = vmatpush1.bf16.msra.mxu0 0
        %742 = vmatprep.subr.bf16.mxu0 0
        %743 = vmatpush1.bf16.msra.mxu0 0
        %744 = vmatprep.subr.bf16.mxu0 0
        %745 = vmatpush1.bf16.msra.mxu0 0
        %746 = vmatprep.subr.bf16.mxu0 0
        %747 = vmatpush1.bf16.msra.mxu0 0
        %748 = vmatprep.subr.bf16.mxu0 0
        %749 = vmatpush1.bf16.msra.mxu0 0
        %750 = vmatprep.subr.bf16.mxu0 0
        %751 = vmatpush1.bf16.msra.mxu0 0
        %752 = vmatprep.subr.bf16.mxu0 0
        %753 = vmatpush1.bf16.msra.mxu0 0
        %754 = vmatprep.subr.bf16.mxu0 0
        %755 = vmatpush1.bf16.msra.mxu0 0
        %756 = vmatprep.mubr.bf16.mxu0 0
        %757 = vmatmul.mubr.bf16.gmra.mrb[0].mxu0 %v713
        %v758 = vpop.f32.mrb[0].mxu0
        %v759 = vadd.f32 0.0, %v758
        %v760 = vpop.f32.mrb[0].mxu0
        %v761 = vpop.f32.mrb[0].mxu0
        %v762 = vadd.f32 0.0, %v761
        %v763 = vpop.f32.mrb[0].mxu0
        %764 = vmatprep.mubr.bf16.mxu0 0
        %765 = vmatmul.mubr.bf16.gmra.mrb[0].mxu0 %v716
        %v766 = vpop.f32.mrb[0].mxu0
        %v767 = vadd.f32 0.0, %v766
        %v768 = vpop.f32.mrb[0].mxu0
        %v769 = vpop.f32.mrb[0].mxu0
        %v770 = vadd.f32 0.0, %v769
        %v771 = vpop.f32.mrb[0].mxu0
        %772 = vmatprep.mubr.bf16.mxu0 0
        %773 = vmatmul.mubr.bf16.gmra.mrb[0].mxu0 %v719
        %v774 = vpop.f32.mrb[0].mxu0
        %v775 = vadd.f32 0.0, %v774
        %v776 = vpop.f32.mrb[0].mxu0
        %v777 = vpop.f32.mrb[0].mxu0
        %v778 = vadd.f32 0.0, %v777
        %v779 = vpop.f32.mrb[0].mxu0
        %780 = vmatprep.mubr.bf16.mxu0 0
        %781 = vmatmul.mubr.bf16.gmra.mrb[0].mxu0 %v722
        %v782 = vpop.f32.mrb[0].mxu0
        %v783 = vadd.f32 0.0, %v782
        %v784 = vpop.f32.mrb[0].mxu0
        %v785 = vpop.f32.mrb[0].mxu0
        %v786 = vadd.f32 0.0, %v785
        %v787 = vpop.f32.mrb[0].mxu0
        %788 = vdwg.mxu0
        %v789 = vlaneseq
        %v790 = vshrl.u32 %v789, 7
        %v791 = vsub.s32 0, %v790
        %v792 = vrot.slane %v517, %v791
        %794 = vbcast.lane.b32.xlu0 %v792, 256
        %v795 = vpop.permute.xlu0 %794
        %v796 = vlaneseq
        %v797 = vshrl.u32 %v796, 7
        %v798 = vsub.s32 1, %v797
        %v799 = vrot.slane %v517, %v798
        %801 = vbcast.lane.b32.xlu0 %v799, 256
        %v802 = vpop.permute.xlu0 %801
        %v803 = vlaneseq
        %v804 = vshrl.u32 %v803, 7
        %v805 = vsub.s32 2, %v804
        %v806 = vrot.slane %v517, %v805
        %808 = vbcast.lane.b32.xlu0 %v806, 256
        %v809 = vpop.permute.xlu0 %808
        %v810 = vlaneseq
        %v811 = vshrl.u32 %v810, 7
        %v812 = vsub.s32 3, %v811
        %v813 = vrot.slane %v517, %v812
        %815 = vbcast.lane.b32.xlu0 %v813, 256
        %v816 = vpop.permute.xlu0 %815
        %v817 = vlaneseq
        %v818 = vshrl.u32 %v817, 7
        %v819 = vsub.s32 4, %v818
        %v820 = vrot.slane %v517, %v819
        %822 = vbcast.lane.b32.xlu0 %v820, 256
        %v823 = vpop.permute.xlu0 %822
        %v824 = vlaneseq
        %v825 = vshrl.u32 %v824, 7
        %v826 = vsub.s32 5, %v825
        %v827 = vrot.slane %v517, %v826
        %829 = vbcast.lane.b32.xlu0 %v827, 256
        %v830 = vpop.permute.xlu0 %829
        %v831 = vlaneseq
        %v832 = vshrl.u32 %v831, 7
        %v833 = vsub.s32 6, %v832
        %v834 = vrot.slane %v517, %v833
        %836 = vbcast.lane.b32.xlu0 %v834, 256
        %v837 = vpop.permute.xlu0 %836
        %v838 = vlaneseq
        %v839 = vshrl.u32 %v838, 7
        %v840 = vsub.s32 7, %v839
        %v841 = vrot.slane %v517, %v840
        %843 = vbcast.lane.b32.xlu0 %v841, 256
        %v844 = vpop.permute.xlu0 %843
        %v845 = vadd.f32 %v759, %v795
        %v846 = vadd.f32 %v762, %v802
        %v847 = vadd.f32 %v767, %v809
        %v848 = vadd.f32 %v770, %v816
        %v849 = vadd.f32 %v775, %v823
        %v850 = vadd.f32 %v778, %v830
        %v851 = vadd.f32 %v783, %v837
        %v852 = vadd.f32 %v786, %v844
        %v853 = vtanh.pop %v845
        %v854 = vtanh.pop %v846
        %v855 = vtanh.pop %v847
        %v856 = vtanh.pop %v848
        %v857 = vtanh.pop %v849
        %v858 = vtanh.pop %v850
        %v859 = vtanh.pop %v851
        %v860 = vtanh.pop %v852
        %v861 = vld [vmem:[%s8] sm:$0x1]
        %v863 = vlaneseq
        %v864 = vshrl.u32 %v863, 7
        %v865 = vsub.s32 0, %v864
        %v866 = vrot.slane %v861, %v865
        %v868 = vmul.f32 %v853, %v866
        %v869 = vmul.f32 %v854, %v866
        %v870 = vmul.f32 %v855, %v866
        %v871 = vmul.f32 %v856, %v866
        %v872 = vmul.f32 %v857, %v866
        %v873 = vmul.f32 %v858, %v866
        %v874 = vmul.f32 %v859, %v866
        %v875 = vmul.f32 %v860, %v866
        %vm876 = vcmask 64512
        %v877 = vsel %vm876, %v868, 0.0
        %878 = vadd.xlane.f32.xlu0 %v877
        %v879 = vpop.xlane.xlu0 %878
        %v880 = vsel %vm876, %v869, 0.0
        %881 = vadd.xlane.f32.xlu0 %v880
        %v882 = vpop.xlane.xlu0 %881
        %v883 = vsel %vm876, %v870, 0.0
        %884 = vadd.xlane.f32.xlu0 %v883
        %v885 = vpop.xlane.xlu0 %884
        %v886 = vsel %vm876, %v871, 0.0
        %887 = vadd.xlane.f32.xlu0 %v886
        %v888 = vpop.xlane.xlu0 %887
        %v889 = vsel %vm876, %v872, 0.0
        %890 = vadd.xlane.f32.xlu0 %v889
        %v891 = vpop.xlane.xlu0 %890
        %v892 = vsel %vm876, %v873, 0.0
        %893 = vadd.xlane.f32.xlu0 %v892
        %v894 = vpop.xlane.xlu0 %893
        %v895 = vsel %vm876, %v874, 0.0
        %896 = vadd.xlane.f32.xlu0 %v895
        %v897 = vpop.xlane.xlu0 %896
        %v898 = vsel %vm876, %v875, 0.0
        %899 = vadd.xlane.f32.xlu0 %v898
        %v900 = vpop.xlane.xlu0 %899
        %v909 = vlaneseq
        %v910 = vand.u32 %v909, 127
        %v911 = vlaneseq
        %v912 = vshrl.u32 %v911, 7
        %v913 = vsub.s32 %v910, %v912
        %v914 = vrot.slane %v879, %v913
        %v915 = vlaneseq
        %v916 = vshrl.u32 %v915, 7
        %v917 = vsub.s32 %v910, %v916
        %v918 = vrot.slane %v882, %v917
        %v919 = vlaneseq
        %v920 = vshrl.u32 %v919, 7
        %v921 = vsub.s32 %v910, %v920
        %v922 = vrot.slane %v885, %v921
        %v923 = vlaneseq
        %v924 = vshrl.u32 %v923, 7
        %v925 = vsub.s32 %v910, %v924
        %v926 = vrot.slane %v888, %v925
        %v927 = vlaneseq
        %v928 = vshrl.u32 %v927, 7
        %v929 = vsub.s32 %v910, %v928
        %v930 = vrot.slane %v891, %v929
        %v931 = vlaneseq
        %v932 = vshrl.u32 %v931, 7
        %v933 = vsub.s32 %v910, %v932
        %v934 = vrot.slane %v894, %v933
        %v935 = vlaneseq
        %v936 = vshrl.u32 %v935, 7
        %v937 = vsub.s32 %v910, %v936
        %v938 = vrot.slane %v897, %v937
        %v939 = vlaneseq
        %v940 = vshrl.u32 %v939, 7
        %v941 = vsub.s32 %v910, %v940
        %v942 = vrot.slane %v900, %v941
        %vm943 = vcmask 1041409
        %v944 = vsel %vm943, %v918, %v914
        %vm945 = vcmask 1042434
        %v946 = vsel %vm945, %v922, %v944
        %vm947 = vcmask 1043459
        %v948 = vsel %vm947, %v926, %v946
        %vm949 = vcmask 1044484
        %v950 = vsel %vm949, %v930, %v948
        %vm951 = vcmask 1045509
        %v952 = vsel %vm951, %v934, %v950
        %vm953 = vcmask 1046534
        %v954 = vsel %vm953, %v938, %v952
        %vm955 = vcmask 1047559
        %v956 = vsel %vm955, %v942, %v954
        %v958 = vsel %vm876, %v956, -inf
        %959 = vmax.xlane.f32.xlu0 %v958
        %v960 = vpop.xlane.xlu0 %959
        %v962 = vlaneseq
        %v963 = vshrl.u32 %v962, 7
        %v964 = vsub.s32 0, %v963
        %v965 = vrot.slane %v960, %v964
        %v966 = vlaneseq
        %v967 = vshrl.u32 %v966, 7
        %v968 = vsub.s32 1, %v967
        %v969 = vrot.slane %v960, %v968
        %v970 = vlaneseq
        %v971 = vshrl.u32 %v970, 7
        %v972 = vsub.s32 2, %v971
        %v973 = vrot.slane %v960, %v972
        %v974 = vlaneseq
        %v975 = vshrl.u32 %v974, 7
        %v976 = vsub.s32 3, %v975
        %v977 = vrot.slane %v960, %v976
        %v978 = vlaneseq
        %v979 = vshrl.u32 %v978, 7
        %v980 = vsub.s32 4, %v979
        %v981 = vrot.slane %v960, %v980
        %v982 = vlaneseq
        %v983 = vshrl.u32 %v982, 7
        %v984 = vsub.s32 5, %v983
        %v985 = vrot.slane %v960, %v984
        %v986 = vlaneseq
        %v987 = vshrl.u32 %v986, 7
        %v988 = vsub.s32 6, %v987
        %v989 = vrot.slane %v960, %v988
        %v990 = vlaneseq
        %v991 = vshrl.u32 %v990, 7
        %v992 = vsub.s32 7, %v991
        %v993 = vrot.slane %v960, %v992
        %v1002 = vsub.f32 %v879, %v965
        %v1003 = vsub.f32 %v882, %v969
        %v1004 = vsub.f32 %v885, %v973
        %v1005 = vsub.f32 %v888, %v977
        %v1006 = vsub.f32 %v891, %v981
        %v1007 = vsub.f32 %v894, %v985
        %v1008 = vsub.f32 %v897, %v989
        %v1009 = vsub.f32 %v900, %v993
        %v1010 = vmul.f32 %v1002, 1.442695
        %v1011 = vpow.pop %v1010
        %v1012 = vmul.f32 %v1003, 1.442695
        %v1013 = vpow.pop %v1012
        %v1014 = vmul.f32 %v1004, 1.442695
        %v1015 = vpow.pop %v1014
        %v1016 = vmul.f32 %v1005, 1.442695
        %v1017 = vpow.pop %v1016
        %v1018 = vmul.f32 %v1006, 1.442695
        %v1019 = vpow.pop %v1018
        %v1020 = vmul.f32 %v1007, 1.442695
        %v1021 = vpow.pop %v1020
        %v1022 = vmul.f32 %v1008, 1.442695
        %v1023 = vpow.pop %v1022
        %v1024 = vmul.f32 %v1009, 1.442695
        %v1025 = vpow.pop %v1024
        %1034 = vset.pattern.permute.xlu0 0
        %1035 = vperm.xlu0 %1034, %v1011
        %v1036 = vpop.permute.xlu0 %1035
        %1037 = vset.pattern.permute.xlu0 0
        %1038 = vperm.xlu0 %1037, %v1013
        %v1039 = vpop.permute.xlu0 %1038
        %1040 = vset.pattern.permute.xlu0 0
        %1041 = vperm.xlu0 %1040, %v1015
        %v1042 = vpop.permute.xlu0 %1041
        %1043 = vset.pattern.permute.xlu0 0
        %1044 = vperm.xlu0 %1043, %v1017
        %v1045 = vpop.permute.xlu0 %1044
        %1046 = vset.pattern.permute.xlu0 0
        %1047 = vperm.xlu0 %1046, %v1019
        %v1048 = vpop.permute.xlu0 %1047
        %1049 = vset.pattern.permute.xlu0 0
        %1050 = vperm.xlu0 %1049, %v1021
        %v1051 = vpop.permute.xlu0 %1050
        %1052 = vset.pattern.permute.xlu0 0
        %1053 = vperm.xlu0 %1052, %v1023
        %v1054 = vpop.permute.xlu0 %1053
        %1055 = vset.pattern.permute.xlu0 0
        %1056 = vperm.xlu0 %1055, %v1025
        %v1057 = vpop.permute.xlu0 %1056
        %v1058 = vlaneseq
        %v1059 = vshrl.u32 %v1058, 7
        %v1060 = vsub.s32 %v910, %v1059
        %v1061 = vrot.slane %v1036, %v1060
        %v1062 = vlaneseq
        %v1063 = vshrl.u32 %v1062, 7
        %v1064 = vsub.s32 %v910, %v1063
        %v1065 = vrot.slane %v1039, %v1064
        %v1066 = vlaneseq
        %v1067 = vshrl.u32 %v1066, 7
        %v1068 = vsub.s32 %v910, %v1067
        %v1069 = vrot.slane %v1042, %v1068
        %v1070 = vlaneseq
        %v1071 = vshrl.u32 %v1070, 7
        %v1072 = vsub.s32 %v910, %v1071
        %v1073 = vrot.slane %v1045, %v1072
        %v1074 = vlaneseq
        %v1075 = vshrl.u32 %v1074, 7
        %v1076 = vsub.s32 %v910, %v1075
        %v1077 = vrot.slane %v1048, %v1076
        %v1078 = vlaneseq
        %v1079 = vshrl.u32 %v1078, 7
        %v1080 = vsub.s32 %v910, %v1079
        %v1081 = vrot.slane %v1051, %v1080
        %v1082 = vlaneseq
        %v1083 = vshrl.u32 %v1082, 7
        %v1084 = vsub.s32 %v910, %v1083
        %v1085 = vrot.slane %v1054, %v1084
        %v1086 = vlaneseq
        %v1087 = vshrl.u32 %v1086, 7
        %v1088 = vsub.s32 %v910, %v1087
        %v1089 = vrot.slane %v1057, %v1088
        %v1090 = vsel %vm943, %v1065, %v1061
        %v1091 = vsel %vm945, %v1069, %v1090
        %v1092 = vsel %vm947, %v1073, %v1091
        %v1093 = vsel %vm949, %v1077, %v1092
        %v1094 = vsel %vm951, %v1081, %v1093
        %v1095 = vsel %vm953, %v1085, %v1094
        %v1096 = vsel %vm955, %v1089, %v1095
        %v1098 = vsel %vm876, %v1096, 0.0
        %1099 = vadd.xlane.f32.xlu0 %v1098
        %v1100 = vpop.xlane.xlu0 %1099
        %v1101 = vrcp.pop %v1100
        %v1103 = vlaneseq
        %v1104 = vshrl.u32 %v1103, 7
        %v1105 = vsub.s32 0, %v1104
        %v1106 = vrot.slane %v1101, %v1105
        %v1107 = vlaneseq
        %v1108 = vshrl.u32 %v1107, 7
        %v1109 = vsub.s32 1, %v1108
        %v1110 = vrot.slane %v1101, %v1109
        %v1111 = vlaneseq
        %v1112 = vshrl.u32 %v1111, 7
        %v1113 = vsub.s32 2, %v1112
        %v1114 = vrot.slane %v1101, %v1113
        %v1115 = vlaneseq
        %v1116 = vshrl.u32 %v1115, 7
        %v1117 = vsub.s32 3, %v1116
        %v1118 = vrot.slane %v1101, %v1117
        %v1119 = vlaneseq
        %v1120 = vshrl.u32 %v1119, 7
        %v1121 = vsub.s32 4, %v1120
        %v1122 = vrot.slane %v1101, %v1121
        %v1123 = vlaneseq
        %v1124 = vshrl.u32 %v1123, 7
        %v1125 = vsub.s32 5, %v1124
        %v1126 = vrot.slane %v1101, %v1125
        %v1127 = vlaneseq
        %v1128 = vshrl.u32 %v1127, 7
        %v1129 = vsub.s32 6, %v1128
        %v1130 = vrot.slane %v1101, %v1129
        %v1131 = vlaneseq
        %v1132 = vshrl.u32 %v1131, 7
        %v1133 = vsub.s32 7, %v1132
        %v1134 = vrot.slane %v1101, %v1133
        %v1143 = vmul.f32 %v1011, %v1106
        %v1144 = vmul.f32 %v1013, %v1110
        %v1145 = vmul.f32 %v1015, %v1114
        %v1146 = vmul.f32 %v1017, %v1118
        %v1147 = vmul.f32 %v1019, %v1122
        %v1148 = vmul.f32 %v1021, %v1126
        %v1149 = vmul.f32 %v1023, %v1130
        %v1150 = vmul.f32 %v1025, %v1134
        %1152 = vset.pattern.permute.xlu0 0
        %1153 = vperm.xlu0 %1152, %v1143
        %v1154 = vpop.permute.xlu0 %1153
        %1157 = vset.pattern.permute.xlu0 0
        %1158 = vperm.xlu0 %1157, %v1144
        %v1159 = vpop.permute.xlu0 %1158
        %1162 = vset.pattern.permute.xlu0 0
        %1163 = vperm.xlu0 %1162, %v1145
        %v1164 = vpop.permute.xlu0 %1163
        %1167 = vset.pattern.permute.xlu0 0
        %1168 = vperm.xlu0 %1167, %v1146
        %v1169 = vpop.permute.xlu0 %1168
        %1172 = vset.pattern.permute.xlu0 0
        %1173 = vperm.xlu0 %1172, %v1147
        %v1174 = vpop.permute.xlu0 %1173
        %1177 = vset.pattern.permute.xlu0 0
        %1178 = vperm.xlu0 %1177, %v1148
        %v1179 = vpop.permute.xlu0 %1178
        %1182 = vset.pattern.permute.xlu0 0
        %1183 = vperm.xlu0 %1182, %v1149
        %v1184 = vpop.permute.xlu0 %1183
        %1187 = vset.pattern.permute.xlu0 0
        %1188 = vperm.xlu0 %1187, %v1150
        %v1189 = vpop.permute.xlu0 %1188
        %v1191 = vmul.f32 %v520, %v1154
        %v1192 = vmul.f32 %v521, %v1159
        %v1193 = vmul.f32 %v522, %v1164
        %v1194 = vmul.f32 %v523, %v1169
        %v1195 = vmul.f32 %v524, %v1174
        %v1196 = vmul.f32 %v525, %v1179
        %v1197 = vmul.f32 %v526, %v1184
        %v1198 = vmul.f32 %v527, %v1189
        %v1199 = vrot.slane %v1191, 4
        %v1200 = vadd.f32 %v1191, %v1199
        %v1201 = vrot.slane %v1200, 2
        %v1202 = vadd.f32 %v1200, %v1201
        %v1203 = vrot.slane %v1202, 1
        %v1204 = vadd.f32 %v1202, %v1203
        %v1205 = vrot.slane %v1192, 4
        %v1206 = vadd.f32 %v1192, %v1205
        %v1207 = vrot.slane %v1206, 2
        %v1208 = vadd.f32 %v1206, %v1207
        %v1209 = vrot.slane %v1208, 1
        %v1210 = vadd.f32 %v1208, %v1209
        %v1211 = vrot.slane %v1193, 4
        %v1212 = vadd.f32 %v1193, %v1211
        %v1213 = vrot.slane %v1212, 2
        %v1214 = vadd.f32 %v1212, %v1213
        %v1215 = vrot.slane %v1214, 1
        %v1216 = vadd.f32 %v1214, %v1215
        %v1217 = vrot.slane %v1194, 4
        %v1218 = vadd.f32 %v1194, %v1217
        %v1219 = vrot.slane %v1218, 2
        %v1220 = vadd.f32 %v1218, %v1219
        %v1221 = vrot.slane %v1220, 1
        %v1222 = vadd.f32 %v1220, %v1221
        %v1223 = vrot.slane %v1195, 4
        %v1224 = vadd.f32 %v1195, %v1223
        %v1225 = vrot.slane %v1224, 2
        %v1226 = vadd.f32 %v1224, %v1225
        %v1227 = vrot.slane %v1226, 1
        %v1228 = vadd.f32 %v1226, %v1227
        %v1229 = vrot.slane %v1196, 4
        %v1230 = vadd.f32 %v1196, %v1229
        %v1231 = vrot.slane %v1230, 2
        %v1232 = vadd.f32 %v1230, %v1231
        %v1233 = vrot.slane %v1232, 1
        %v1234 = vadd.f32 %v1232, %v1233
        %v1235 = vrot.slane %v1197, 4
        %v1236 = vadd.f32 %v1197, %v1235
        %v1237 = vrot.slane %v1236, 2
        %v1238 = vadd.f32 %v1236, %v1237
        %v1239 = vrot.slane %v1238, 1
        %v1240 = vadd.f32 %v1238, %v1239
        %v1241 = vrot.slane %v1198, 4
        %v1242 = vadd.f32 %v1198, %v1241
        %v1243 = vrot.slane %v1242, 2
        %v1244 = vadd.f32 %v1242, %v1243
        %v1245 = vrot.slane %v1244, 1
        %v1246 = vadd.f32 %v1244, %v1245
        %v1255 = vsel %vm943, %v1210, %v1204
        %v1256 = vsel %vm945, %v1216, %v1255
        %v1257 = vsel %vm947, %v1222, %v1256
        %v1258 = vsel %vm949, %v1228, %v1257
        %v1259 = vsel %vm951, %v1234, %v1258
        %v1260 = vsel %vm953, %v1240, %v1259
        %v1261 = vsel %vm955, %v1246, %v1260
        %1263 = vst [vmem:[%s339] sm:$0xff] %v1261
        %s1264 = sand.u32 %s230, 1
        %s1265 = scalar_lea.sflag [#allocation3], %s1264
        %s1266 = sand.u32 %s230, 1
        %s1267 = smul.addr %s1266, 8
        %s1268 = scalar_lea.vmem [#allocation2], %s1267
        // Predicated region
        $region57: #{tpu_custom_call.1} parent=55 // pred_check
          %p1269 = pneg %p240
        $region58: #{tpu_custom_call.1} parent=55 // pred_check_branch
          %1271 = sbr.rel (%p1269) target = $region60
        $region59: #{tpu_custom_call.1} parent=55 // pred_region
          %s1273 = ssub.s32 128, 128
          %1274 = vsyncadd %s1265, %s1273
          %s1275 = smul.addr %s23, 128
          %s1276 = scalar_lea.hbm %s9, %s1275
          %s1278 = sshll.u32 %s1268, 4
          %s1279 = int_to_ptr.vmem [resolvable:$true] %s1278
          %1281 = dma.vmem_to_hbm [thread:$0]  %s1279, 128, %s1276, %s1265
        $region60: #{tpu_custom_call.1} parent=55 // pred_fallthru
          _
      $region56: #{tpu_custom_call.1} parent=5 // pred_fallthru
        _
      %p1282 = scmp.le.s32.totalorder 2, %s18
      // Predicated region
      $region61: #{tpu_custom_call.1} parent=5 // pred_check
        %p1283 = pneg %p1282
      $region62: #{tpu_custom_call.1} parent=5 // pred_check_branch
        %1285 = sbr.rel (%p1283) target = $region64
      $region63: #{tpu_custom_call.1} parent=5 // pred_region
        %s1286 = ssub.s32 %s18, 2
        // Predicated region
        $region65: #{tpu_custom_call.1} parent=63 // pred_check
          %p1287 = pneg %p246
        $region66: #{tpu_custom_call.1} parent=63 // pred_check_branch
          %1289 = sbr.rel (%p1287) target = $region68
        $region67: #{tpu_custom_call.1} parent=63 // pred_region
          %s1290 = sand.u32 %s231, 1
          %s1291 = scalar_lea.sflag [#allocation3], %s1290
          %s1292 = sand.u32 %s231, 1
          %s1293 = smul.addr %s1292, 8
          %s1294 = scalar_lea.vmem [#allocation2], %s1293
          %1295 = dma.done %s1291, 128
        $region68: #{tpu_custom_call.1} parent=63 // pred_fallthru
          _
      $region64: #{tpu_custom_call.1} parent=5 // pred_fallthru
        _
    $region6: #{tpu_custom_call.1} parent=1 // loop_footer
      %s22 = sadd.s32 1, %s18
    $region7: #{tpu_custom_call.1} parent=1 // loop_footer_branch
      %17 = sbr.rel target = $region3
    $region8: #{tpu_custom_call.1} parent=1 // loop_exit
      _
    %1296 = vsyncpa [#allocation3], 1
    %s1297 = scalar_lea.sflag [#allocation3], 1
    %1298 = vsyncpa %s1297, 1

</llo_original>
